<compile_context>
chip_gen: v7x
topology: tpu7x:2x2x1
jax: 0.10.0
libtpu: 0.0.40
codegen_flags: <defaults>
</compile_context>

<pallas_src>
import functools

import jax
import jax.numpy as jnp
from jax.experimental import pallas as pl
from jax.experimental.pallas import tpu as pltpu


def _round_up(x, m):
    return ((x + m - 1) // m) * m


def _acnet_kernel(obs_ref, w1_ref, b1_ref, w2_ref, b2_ref, w3_ref, b3_ref,
                  mask_ref, probs_ref, value_ref, *, action_dim, use_bf16):
    x = obs_ref[...]
    if use_bf16:
        x = x.astype(jnp.bfloat16)          # in-kernel cast (free VPU work)

    # Shared feature extractor: Linear(state_dim, 64) + ReLU        (matmul 1)
    feat = jnp.dot(x, w1_ref[...], preferred_element_type=jnp.float32)
    feat = jnp.maximum(feat + b1_ref[...], 0.0)
    if use_bf16:
        feat = feat.astype(jnp.bfloat16)

    # Fused actor/critic hidden layers: one (64, 64) matmul.         (matmul 2)
    # Columns [0:32] = actor hidden, [32:64] = critic hidden.
    h = jnp.dot(feat, w2_ref[...], preferred_element_type=jnp.float32)
    h = jnp.maximum(h + b2_ref[...], 0.0)
    if use_bf16:
        h = h.astype(jnp.bfloat16)

    # Fused, lane-padded output layer (block-diagonal weight):       (matmul 3)
    #   y[:, :action_dim]   = actor logits
    #   y[:, action_dim]    = critic value
    #   y[:, action_dim+1:] = zeros (MXU padding only; never stored)
    y = jnp.dot(h, w3_ref[...], preferred_element_type=jnp.float32) + b3_ref[...]

    # Numerically-stable softmax over the logit lanes only.  mask_ref is a
    # resident (1, P) additive mask: 0 on logit lanes, -1e30 on value/padding
    # lanes, so non-logit lanes underflow to exactly 0 after exp.
    masked = y + mask_ref[...]
    m = jnp.max(masked, axis=-1, keepdims=True)
    e = jnp.exp(masked - m)
    denom = jnp.sum(e, axis=-1, keepdims=True)
    probs = e / denom                        # exact division: rows sum to 1

    probs_ref[...] = probs[:, :action_dim].astype(probs_ref.dtype)
    value_ref[...] = y[:, action_dim:action_dim + 1].astype(value_ref.dtype)


def acnet_forward(obs, params, *, batch_tile=2048, use_bf16=False):
    """ACNet forward on TPU via Pallas.

    obs: (B, state_dim) float32
    params: dict with w_feat (S,64), b_feat (1,64), w_a1 (64,32), b_a1 (1,32),
            w_a2 (32,A), b_a2 (1,A), w_c1 (64,32), b_c1 (1,32), w_c2 (32,1),
            b_c2 (1,1).
    Returns (action_prob (B, A), value (B, 1)).
    """
    B, state_dim = obs.shape
    action_dim = params["w_a2"].shape[1]
    hidden2 = params["w_a1"].shape[1]                 # 32
    padded_out = _round_up(action_dim + 1, 128)       # MXU-padded output width

    # ---- fuse parameters outside the kernel (tiny, one-time work) ----
    w1 = params["w_feat"]                                             # (S, 64)
    b1 = params["b_feat"]                                             # (1, 64)
    w2 = jnp.concatenate([params["w_a1"], params["w_c1"]], axis=1)    # (64, 64)
    b2 = jnp.concatenate([params["b_a1"], params["b_c1"]], axis=1)    # (1, 64)
    w3 = jnp.zeros((2 * hidden2, padded_out), jnp.float32)            # (64, P)
    w3 = w3.at[:hidden2, :action_dim].set(params["w_a2"])
    w3 = w3.at[hidden2:, action_dim].set(params["w_c2"][:, 0])
    b3 = jnp.zeros((1, padded_out), jnp.float32)
    b3 = b3.at[:, :action_dim].set(params["b_a2"])
    b3 = b3.at[:, action_dim].set(params["b_c2"][0, 0])

    # Resident additive softmax mask: 0 on logit lanes, -1e30 elsewhere.
    lane = jnp.arange(padded_out, dtype=jnp.int32)[None, :]
    softmax_mask = jnp.where(lane < action_dim, 0.0, -1e30).astype(jnp.float32)

    if use_bf16:
        # MXU weight operands only; obs is cast inside the kernel, and bias
        # adds / ReLU / softmax stay f32 (v5e has no bf16 VPU/EUP).
        w1 = w1.astype(jnp.bfloat16)
        w2 = w2.astype(jnp.bfloat16)
        w3 = w3.astype(jnp.bfloat16)

    # ---- batch tiling: big tiles, ragged last block (no jnp.pad copy) ----
    # Clamp the tile so the grid keeps >= 2 steps when B allows: the
    # "parallel" batch axis then shards across both v7x TensorCores.
    tile = max(8, min(_round_up(batch_tile, 8), _round_up(pl.cdiv(B, 2), 8)))
    grid = (pl.cdiv(B, tile),)

    # Weights/biases/mask keep a constant block index -> VMEM-resident across
    # grid steps (no re-DMA).  pl.Buffered(1) would trim their redundant second
    # buffer but the saving is ~100 KB; omitted for robustness.
    def resident(arr):
        return pl.BlockSpec(arr.shape, lambda i: (0, 0))

    in_specs = [
        pl.BlockSpec((tile, state_dim), lambda i: (i, 0)),
        resident(w1), resident(b1),
        resident(w2), resident(b2),
        resident(w3), resident(b3),
        resident(softmax_mask),
    ]
    out_specs = (
        pl.BlockSpec((tile, action_dim), lambda i: (i, 0)),   # probs
        pl.BlockSpec((tile, 1), lambda i: (i, 0)),            # value
    )
    out_shape = (
        jax.ShapeDtypeStruct((B, action_dim), jnp.float32),
        jax.ShapeDtypeStruct((B, 1), jnp.float32),
    )

    probs, value = pl.pallas_call(
        functools.partial(_acnet_kernel, action_dim=action_dim,
                          use_bf16=use_bf16),
        grid_spec=pltpu.PrefetchScalarGridSpec(
            num_scalar_prefetch=0,
            grid=grid,
            in_specs=in_specs,
            out_specs=out_specs,
        ),
        out_shape=out_shape,
        compiler_params=pltpu.CompilerParams(
            dimension_semantics=("parallel",),
        ),
    )(obs, w1, b1, w2, b2, w3, b3, softmax_mask)
    return probs, value


def init_params(key, state_dim, action_dim):
    """Deterministic synthetic parameters (PyTorch-like uniform fan-in init)."""
    def linear(key, fan_in, fan_out):
        kw, kb = jax.random.split(key)
        bound = 1.0 / jnp.sqrt(fan_in)
        w = jax.random.uniform(kw, (fan_in, fan_out), jnp.float32, -bound, bound)
        b = jax.random.uniform(kb, (1, fan_out), jnp.float32, -bound, bound)
        return w, b

    keys = jax.random.split(key, 5)
    w_feat, b_feat = linear(keys[0], state_dim, 64)
    w_a1, b_a1 = linear(keys[1], 64, 32)
    w_a2, b_a2 = linear(keys[2], 32, action_dim)
    w_c1, b_c1 = linear(keys[3], 64, 32)
    w_c2, b_c2 = linear(keys[4], 32, 1)
    return dict(
        w_feat=w_feat, b_feat=b_feat,
        w_a1=w_a1, b_a1=b_a1,
        w_a2=w_a2, b_a2=b_a2,
        w_c1=w_c1, b_c1=b_c1,
        w_c2=w_c2, b_c2=b_c2,
    )


def acnet_reference(obs, p):
    """Pure-JAX reference for correctness checking."""
    feat = jax.nn.relu(obs @ p["w_feat"] + p["b_feat"])
    a = jax.nn.relu(feat @ p["w_a1"] + p["b_a1"])
    probs = jax.nn.softmax(a @ p["w_a2"] + p["b_a2"], axis=-1)
    c = jax.nn.relu(feat @ p["w_c1"] + p["b_c1"])
    value = c @ p["w_c2"] + p["b_c2"]
    return probs, value


if __name__ == "__main__":
    key = jax.random.PRNGKey(0)
    k_param, k_obs = jax.random.split(key)

    state_dim = 32
    action_dim = 16
    params = init_params(k_param, state_dim, action_dim)

    # Small smoke test (B=8, single tile) plus a batch that is not a multiple
    # of the tile, exercising the ragged last block and a multi-step grid.
    for batch, tile in ((8, 2048), (200, 64)):
        obs = jax.random.normal(jax.random.fold_in(k_obs, batch),
                                (batch, state_dim), dtype=jnp.float32)

        probs, value = acnet_forward(obs, params, batch_tile=tile)
        jax.block_until_ready((probs, value))

        probs_ref, value_ref = acnet_reference(obs, params)
        assert probs.shape == (batch, action_dim)
        assert value.shape == (batch, 1)
        assert jnp.allclose(probs, probs_ref, atol=1e-4, rtol=1e-4), "probs mismatch"
        assert jnp.allclose(value, value_ref, atol=1e-4, rtol=1e-4), "value mismatch"
        assert jnp.allclose(jnp.sum(probs, axis=-1), 1.0, atol=1e-4), "softmax sum"

    print("KERNEL_OK")
</pallas_src>

<mosaic_0001>
module attributes {stable_mosaic.version = 11 : i64} {
  func.func @_acnet_kernel(%arg0: i32, %arg1: memref<8x32xf32, #tpu.memory_space<vmem>>, %arg2: memref<32x64xf32, #tpu.memory_space<vmem>>, %arg3: memref<1x64xf32, #tpu.memory_space<vmem>>, %arg4: memref<64x64xf32, #tpu.memory_space<vmem>>, %arg5: memref<1x64xf32, #tpu.memory_space<vmem>>, %arg6: memref<64x128xf32, #tpu.memory_space<vmem>>, %arg7: memref<1x128xf32, #tpu.memory_space<vmem>>, %arg8: memref<1x128xf32, #tpu.memory_space<vmem>>, %arg9: memref<8x16xf32, #tpu.memory_space<vmem>>, %arg10: memref<8x1xf32, #tpu.memory_space<vmem>>) attributes {dimension_semantics = [#tpu.dimension_semantics<parallel>], iteration_bounds = array<i64: 1>, scalar_prefetch = 0 : i64, scratch_operands = 0 : i64, tpu.core_type = #tpu.core_type<tc>, window_params = [{transform_indices = @transform_0, window_bounds = array<i64: 8, 32>}, {pipeline_mode = #tpu.pipeline_mode<synchronous>, transform_indices = @transform_1, window_bounds = array<i64: 32, 64>}, {pipeline_mode = #tpu.pipeline_mode<synchronous>, transform_indices = @transform_2, window_bounds = array<i64: 1, 64>}, {pipeline_mode = #tpu.pipeline_mode<synchronous>, transform_indices = @transform_3, window_bounds = array<i64: 64, 64>}, {pipeline_mode = #tpu.pipeline_mode<synchronous>, transform_indices = @transform_4, window_bounds = array<i64: 1, 64>}, {pipeline_mode = #tpu.pipeline_mode<synchronous>, transform_indices = @transform_5, window_bounds = array<i64: 64, 128>}, {pipeline_mode = #tpu.pipeline_mode<synchronous>, transform_indices = @transform_6, window_bounds = array<i64: 1, 128>}, {pipeline_mode = #tpu.pipeline_mode<synchronous>, transform_indices = @transform_7, window_bounds = array<i64: 1, 128>}, {transform_indices = @transform_8, window_bounds = array<i64: 8, 16>}, {transform_indices = @transform_9, window_bounds = array<i64: 8, 1>}]} {
    %c0 = arith.constant 0 : index
    %c0_0 = arith.constant 0 : index
    %0 = vector.load %arg1[%c0, %c0_0] : memref<8x32xf32, #tpu.memory_space<vmem>>, vector<8x32xf32>
    %c0_1 = arith.constant 0 : index
    %c0_2 = arith.constant 0 : index
    %1 = vector.load %arg2[%c0_1, %c0_2] : memref<32x64xf32, #tpu.memory_space<vmem>>, vector<32x64xf32>
    %cst = arith.constant dense<0.000000e+00> : vector<8x64xf32>
    %2 = tpu.matmul %0, %1, %cst {dimension_numbers = #tpu.dot_dimension_numbers<[1], [0], [0], [1], [0, 0, 1, 1], [], []>} : vector<8x32xf32>, vector<32x64xf32>, vector<8x64xf32> -> vector<8x64xf32>
    %c0_3 = arith.constant 0 : index
    %c0_4 = arith.constant 0 : index
    %3 = vector.load %arg3[%c0_3, %c0_4] : memref<1x64xf32, #tpu.memory_space<vmem>>, vector<1x64xf32>
    %4 = vector.broadcast %3 : vector<1x64xf32> to vector<8x64xf32>
    %5 = arith.addf %2, %4 : vector<8x64xf32>
    %cst_5 = arith.constant 0.000000e+00 : f32
    %6 = vector.broadcast %cst_5 : f32 to vector<8x64xf32>
    %7 = arith.maximumf %5, %6 : vector<8x64xf32>
    %c0_6 = arith.constant 0 : index
    %c0_7 = arith.constant 0 : index
    %8 = vector.load %arg4[%c0_6, %c0_7] : memref<64x64xf32, #tpu.memory_space<vmem>>, vector<64x64xf32>
    %cst_8 = arith.constant dense<0.000000e+00> : vector<8x64xf32>
    %9 = tpu.matmul %7, %8, %cst_8 {dimension_numbers = #tpu.dot_dimension_numbers<[1], [0], [0], [1], [0, 0, 1, 1], [], []>} : vector<8x64xf32>, vector<64x64xf32>, vector<8x64xf32> -> vector<8x64xf32>
    %c0_9 = arith.constant 0 : index
    %c0_10 = arith.constant 0 : index
    %10 = vector.load %arg5[%c0_9, %c0_10] : memref<1x64xf32, #tpu.memory_space<vmem>>, vector<1x64xf32>
    %11 = vector.broadcast %10 : vector<1x64xf32> to vector<8x64xf32>
    %12 = arith.addf %9, %11 : vector<8x64xf32>
    %cst_11 = arith.constant 0.000000e+00 : f32
    %13 = vector.broadcast %cst_11 : f32 to vector<8x64xf32>
    %14 = arith.maximumf %12, %13 : vector<8x64xf32>
    %c0_12 = arith.constant 0 : index
    %c0_13 = arith.constant 0 : index
    %15 = vector.load %arg6[%c0_12, %c0_13] : memref<64x128xf32, #tpu.memory_space<vmem>>, vector<64x128xf32>
    %cst_14 = arith.constant dense<0.000000e+00> : vector<8x128xf32>
    %16 = tpu.matmul %14, %15, %cst_14 {dimension_numbers = #tpu.dot_dimension_numbers<[1], [0], [0], [1], [0, 0, 1, 1], [], []>} : vector<8x64xf32>, vector<64x128xf32>, vector<8x128xf32> -> vector<8x128xf32>
    %c0_15 = arith.constant 0 : index
    %c0_16 = arith.constant 0 : index
    %17 = vector.load %arg7[%c0_15, %c0_16] : memref<1x128xf32, #tpu.memory_space<vmem>>, vector<1x128xf32>
    %18 = vector.broadcast %17 : vector<1x128xf32> to vector<8x128xf32>
    %19 = arith.addf %16, %18 : vector<8x128xf32>
    %c0_17 = arith.constant 0 : index
    %c0_18 = arith.constant 0 : index
    %20 = vector.load %arg8[%c0_17, %c0_18] : memref<1x128xf32, #tpu.memory_space<vmem>>, vector<1x128xf32>
    %21 = vector.broadcast %20 : vector<1x128xf32> to vector<8x128xf32>
    %22 = arith.addf %19, %21 : vector<8x128xf32>
    %cst_19 = arith.constant dense<0xFF800000> : vector<8xf32>
    %23 = vector.multi_reduction <maximumf>, %22, %cst_19 [1] : vector<8x128xf32> to vector<8xf32>
    %24 = vector.shape_cast %23 : vector<8xf32> to vector<8x1xf32>
    %25 = vector.broadcast %24 : vector<8x1xf32> to vector<8x128xf32>
    %26 = arith.subf %22, %25 : vector<8x128xf32>
    %27 = math.exp %26 : vector<8x128xf32>
    %cst_20 = arith.constant dense<0.000000e+00> : vector<8xf32>
    %28 = vector.multi_reduction <add>, %27, %cst_20 [1] : vector<8x128xf32> to vector<8xf32>
    %29 = vector.shape_cast %28 : vector<8xf32> to vector<8x1xf32>
    %30 = vector.broadcast %29 : vector<8x1xf32> to vector<8x128xf32>
    %31 = arith.divf %27, %30 : vector<8x128xf32>
    %32 = vector.extract_strided_slice %31 {offsets = [0, 0], sizes = [8, 16], strides = [1, 1]} : vector<8x128xf32> to vector<8x16xf32>
    %c0_21 = arith.constant 0 : index
    %c0_22 = arith.constant 0 : index
    %33 = vector.load %arg9[%c0_21, %c0_22] : memref<8x16xf32, #tpu.memory_space<vmem>>, vector<8x16xf32>
    tpu.vector_store %arg9[%c0_21, %c0_22], %32 {strides = array<i32>} : memref<8x16xf32, #tpu.memory_space<vmem>>, vector<8x16xf32>,
    %34 = vector.extract_strided_slice %19 {offsets = [0, 16], sizes = [8, 1], strides = [1, 1]} : vector<8x128xf32> to vector<8x1xf32>
    %c0_23 = arith.constant 0 : index
    %c0_24 = arith.constant 0 : index
    %35 = vector.load %arg10[%c0_23, %c0_24] : memref<8x1xf32, #tpu.memory_space<vmem>>, vector<8x1xf32>
    tpu.vector_store %arg10[%c0_23, %c0_24], %34 {strides = array<i32>} : memref<8x1xf32, #tpu.memory_space<vmem>>, vector<8x1xf32>,
    return
  }
  func.func @transform_0(%arg0: i32) -> (i32, i32) {
    %c0_i32 = arith.constant 0 : i32
    %c0_i32_0 = arith.constant 0 : i32
    return %arg0, %c0_i32 : i32, i32
  }
  func.func @transform_1(%arg0: i32) -> (i32, i32) {
    %c0_i32 = arith.constant 0 : i32
    %c0_i32_0 = arith.constant 0 : i32
    %c0_i32_1 = arith.constant 0 : i32
    return %c0_i32, %c0_i32_0 : i32, i32
  }
  func.func @transform_2(%arg0: i32) -> (i32, i32) {
    %c0_i32 = arith.constant 0 : i32
    %c0_i32_0 = arith.constant 0 : i32
    %c0_i32_1 = arith.constant 0 : i32
    return %c0_i32, %c0_i32_0 : i32, i32
  }
  func.func @transform_3(%arg0: i32) -> (i32, i32) {
    %c0_i32 = arith.constant 0 : i32
    %c0_i32_0 = arith.constant 0 : i32
    %c0_i32_1 = arith.constant 0 : i32
    return %c0_i32, %c0_i32_0 : i32, i32
  }
  func.func @transform_4(%arg0: i32) -> (i32, i32) {
    %c0_i32 = arith.constant 0 : i32
    %c0_i32_0 = arith.constant 0 : i32
    %c0_i32_1 = arith.constant 0 : i32
    return %c0_i32, %c0_i32_0 : i32, i32
  }
  func.func @transform_5(%arg0: i32) -> (i32, i32) {
    %c0_i32 = arith.constant 0 : i32
    %c0_i32_0 = arith.constant 0 : i32
    %c0_i32_1 = arith.constant 0 : i32
    return %c0_i32, %c0_i32_0 : i32, i32
  }
  func.func @transform_6(%arg0: i32) -> (i32, i32) {
    %c0_i32 = arith.constant 0 : i32
    %c0_i32_0 = arith.constant 0 : i32
    %c0_i32_1 = arith.constant 0 : i32
    return %c0_i32, %c0_i32_0 : i32, i32
  }
  func.func @transform_7(%arg0: i32) -> (i32, i32) {
    %c0_i32 = arith.constant 0 : i32
    %c0_i32_0 = arith.constant 0 : i32
    %c0_i32_1 = arith.constant 0 : i32
    return %c0_i32, %c0_i32_0 : i32, i32
  }
  func.func @transform_8(%arg0: i32) -> (i32, i32) {
    %c0_i32 = arith.constant 0 : i32
    %c0_i32_0 = arith.constant 0 : i32
    return %arg0, %c0_i32 : i32, i32
  }
  func.func @transform_9(%arg0: i32) -> (i32, i32) {
    %c0_i32 = arith.constant 0 : i32
    %c0_i32_0 = arith.constant 0 : i32
    return %arg0, %c0_i32 : i32, i32
  }
}

</mosaic_0001>

<llo_original>
// kernel: tpu_custom_call.1
$region0: #{tpu_custom_call.1}
  #allocation0 [shape = 'u32[]', space=smem, size = 0x4, offset = 0x4, fixed_abs, tag = 'smem constant byte address 0x4 - core index']
  #allocation1 [shape = 'u32[144,128]{1,0:T(1,128)}', space=vmem, size = 0x12000, scoped, tag = 'internal scratch']
  %s0 = inlined_call_operand.hbm [shape: f32[8,32], index: 0, kind: input, shape index: {}]
  %s1 = inlined_call_operand.hbm [shape: f32[32,64], index: 1, kind: input, shape index: {}]
  %s2 = inlined_call_operand.vmem [shape: f32[1,64], index: 2, kind: input, shape index: {}]
  %s3 = inlined_call_operand.hbm [shape: f32[64,64], index: 3, kind: input, shape index: {}]
  %s4 = inlined_call_operand.vmem [shape: f32[1,64], index: 4, kind: input, shape index: {}]
  %s5 = inlined_call_operand.hbm [shape: f32[64,128], index: 5, kind: input, shape index: {}]
  %s6 = inlined_call_operand.vmem [shape: f32[1,128], index: 6, kind: input, shape index: {}]
  %s7 = inlined_call_operand.vmem [shape: f32[1,128], index: 7, kind: input, shape index: {}]
  %s8 = inlined_call_operand.hbm [shape: f32[8,16], index: 8, kind: output, shape index: {0}]
  %s9 = inlined_call_operand.vmem [shape: f32[8,1], index: 9, kind: output, shape index: {1}]
  %10 = xla_tuple %s8, %s9
  %s11 = sld [smem:[#allocation0]]
  $region66: #{tpu_custom_call.1} parent=0
    _
  %s13 = ssub.s32 1, %s11
  %s14 = scalar_select 0, %s13, %s11
  $region1: #{tpu_custom_call.1} parent=0
    #allocation2 [shape = 'u8[4096]{0}', space=vmem, size = 0x1000, scoped, tag = 'input window, operand 0, single buffered']
    #allocation3 [shape = 's32[1]{0}', space=sflag, size = 0x4, scoped, tag = 'scoped memory for tpu_custom_call.1']
    #allocation4 [shape = 's32[1]{0}', space=sflag, size = 0x4, scoped, tag = 'scoped memory for tpu_custom_call.1']
    #allocation5 [shape = 'u8[16384]{0}', space=vmem, size = 0x4000, scoped, tag = 'input window, operand 1, single buffered']
    #allocation6 [shape = 's32[1]{0}', space=sflag, size = 0x4, scoped, tag = 'scoped memory for tpu_custom_call.1']
    #allocation7 [shape = 'u8[32768]{0}', space=vmem, size = 0x8000, scoped, tag = 'input window, operand 3, single buffered']
    #allocation8 [shape = 'u8[32768]{0}', space=vmem, size = 0x8000, scoped, tag = 'input window, operand 5, single buffered']
    #allocation9 [shape = 's32[1]{0}', space=sflag, size = 0x4, scoped, tag = 'scoped memory for tpu_custom_call.1']
    #allocation10 [shape = 'u8[4096]{0}', space=vmem, size = 0x1000, scoped, tag = 'output window, operand 0, single buffered']
    %15 = vsyncpa [#allocation3], 0
    %16 = vsyncpa [#allocation6], 0
    %17 = vsyncpa [#allocation9], 0
    %18 = vsyncpa [#allocation4], 0
    // Predicated region
    $region2: #{tpu_custom_call.1} parent=1 // pred_check
      _
    $region3: #{tpu_custom_call.1} parent=1 // pred_check_branch
      %20 = sbr.rel (0) target = $region5
    $region4: #{tpu_custom_call.1} parent=1 // pred_region
      %s22 = ssub.s32 128, 128
      %23 = vsyncadd [#allocation3], %s22
      %s25 = sshll.u32 [#allocation2], 4
      %s26 = int_to_ptr.vmem [resolvable:$true] %s25
      %28 = dma.hbm_to_vmem [thread:$0]  %s0, 128, %s26, [#allocation3]
    $region5: #{tpu_custom_call.1} parent=1 // pred_fallthru
      _
    // Predicated region
    $region6: #{tpu_custom_call.1} parent=1 // pred_check
      _
    $region7: #{tpu_custom_call.1} parent=1 // pred_check_branch
      %30 = sbr.rel (0) target = $region9
    $region8: #{tpu_custom_call.1} parent=1 // pred_region
      %s32 = ssub.s32 512, 512
      %33 = vsyncadd [#allocation6], %s32
      %s34 = sshll.u32 [#allocation5], 4
      %s35 = int_to_ptr.vmem [resolvable:$true] %s34
      %40 = dma.hbm_to_vmem [thread:$0]  %s1, 512, %s35, [#allocation6], 128, 128, 8
    $region9: #{tpu_custom_call.1} parent=1 // pred_fallthru
      _
    // Predicated region
    $region10: #{tpu_custom_call.1} parent=1 // pred_check
      _
    $region11: #{tpu_custom_call.1} parent=1 // pred_check_branch
      %42 = sbr.rel (0) target = $region13
    $region12: #{tpu_custom_call.1} parent=1 // pred_region
      _
    $region13: #{tpu_custom_call.1} parent=1 // pred_fallthru
      _
    // Predicated region
    $region14: #{tpu_custom_call.1} parent=1 // pred_check
      _
    $region15: #{tpu_custom_call.1} parent=1 // pred_check_branch
      %44 = sbr.rel (0) target = $region17
    $region16: #{tpu_custom_call.1} parent=1 // pred_region
      %s46 = ssub.s32 1024, 1024
      %47 = vsyncadd [#allocation6], %s46
      %s48 = sshll.u32 [#allocation7], 4
      %s49 = int_to_ptr.vmem [resolvable:$true] %s48
      %54 = dma.hbm_to_vmem [thread:$0]  %s3, 1024, %s49, [#allocation6], 128, 128, 8
    $region17: #{tpu_custom_call.1} parent=1 // pred_fallthru
      _
    // Predicated region
    $region18: #{tpu_custom_call.1} parent=1 // pred_check
      _
    $region19: #{tpu_custom_call.1} parent=1 // pred_check_branch
      %56 = sbr.rel (0) target = $region21
    $region20: #{tpu_custom_call.1} parent=1 // pred_region
      _
    $region21: #{tpu_custom_call.1} parent=1 // pred_fallthru
      _
    // Predicated region
    $region22: #{tpu_custom_call.1} parent=1 // pred_check
      _
    $region23: #{tpu_custom_call.1} parent=1 // pred_check_branch
      %58 = sbr.rel (0) target = $region25
    $region24: #{tpu_custom_call.1} parent=1 // pred_region
      %s60 = ssub.s32 1024, 1024
      %61 = vsyncadd [#allocation9], %s60
      %s62 = sshll.u32 [#allocation8], 4
      %s63 = int_to_ptr.vmem [resolvable:$true] %s62
      %68 = dma.hbm_to_vmem [thread:$0]  %s5, 1024, %s63, [#allocation9], 128, 128, 8
    $region25: #{tpu_custom_call.1} parent=1 // pred_fallthru
      _
    // Predicated region
    $region26: #{tpu_custom_call.1} parent=1 // pred_check
      _
    $region27: #{tpu_custom_call.1} parent=1 // pred_check_branch
      %70 = sbr.rel (0) target = $region29
    $region28: #{tpu_custom_call.1} parent=1 // pred_region
      _
    $region29: #{tpu_custom_call.1} parent=1 // pred_fallthru
      _
    // Predicated region
    $region30: #{tpu_custom_call.1} parent=1 // pred_check
      _
    $region31: #{tpu_custom_call.1} parent=1 // pred_check_branch
      %72 = sbr.rel (0) target = $region33
    $region32: #{tpu_custom_call.1} parent=1 // pred_region
      _
    $region33: #{tpu_custom_call.1} parent=1 // pred_fallthru
      _
    // Predicated region
    $region34: #{tpu_custom_call.1} parent=1 // pred_check
      _
    $region35: #{tpu_custom_call.1} parent=1 // pred_check_branch
      %74 = sbr.rel (0) target = $region37
    $region36: #{tpu_custom_call.1} parent=1 // pred_region
      %75 = dma.done [#allocation3], 128
    $region37: #{tpu_custom_call.1} parent=1 // pred_fallthru
      _
    // Predicated region
    $region38: #{tpu_custom_call.1} parent=1 // pred_check
      _
    $region39: #{tpu_custom_call.1} parent=1 // pred_check_branch
      %77 = sbr.rel (0) target = $region41
    $region40: #{tpu_custom_call.1} parent=1 // pred_region
      %78 = dma.done [#allocation6], 512
    $region41: #{tpu_custom_call.1} parent=1 // pred_fallthru
      _
    // Predicated region
    $region42: #{tpu_custom_call.1} parent=1 // pred_check
      _
    $region43: #{tpu_custom_call.1} parent=1 // pred_check_branch
      %80 = sbr.rel (0) target = $region45
    $region44: #{tpu_custom_call.1} parent=1 // pred_region
      %81 = dma.done [#allocation6], 1024
    $region45: #{tpu_custom_call.1} parent=1 // pred_fallthru
      _
    // Predicated region
    $region46: #{tpu_custom_call.1} parent=1 // pred_check
      _
    $region47: #{tpu_custom_call.1} parent=1 // pred_check_branch
      %83 = sbr.rel (0) target = $region49
    $region48: #{tpu_custom_call.1} parent=1 // pred_region
      %84 = dma.done [#allocation9], 1024
    $region49: #{tpu_custom_call.1} parent=1 // pred_fallthru
      _
    %v85 = vld [vmem:[#allocation2] sm:$0xff]
    %v86 = vld [vmem:[#allocation5] sm:$0xff]
    %v87 = vld [vmem:[#allocation5 + $0x8] sm:$0xff]
    %v88 = vld [vmem:[#allocation5 + $0x10] sm:$0xff]
    %v89 = vld [vmem:[#allocation5 + $0x18] sm:$0xff]
    %v90 = vld [vmem:[%s2] sm:$0x1]
    %v92 = vlaneseq
    %v93 = vshrl.u32 %v92, 7
    %v94 = vsub.s32 0, %v93
    %v95 = vrot.slane %v90, %v94
    %vm97 = vcmask 261120
    %v99 = vsel %vm97, %v85, 0
    %101 = vmatprep.subr.mxu0 0.0
    %102 = vmatpush1.msra.mxu0 %v86
    %103 = vmatprep.subr.mxu0 0.0
    %104 = vmatpush1.msra.mxu0 %v87
    %105 = vmatprep.subr.mxu0 0.0
    %106 = vmatpush1.msra.mxu0 %v88
    %107 = vmatprep.subr.mxu0 0.0
    %108 = vmatpush1.msra.mxu0 %v89
    %109 = vmatprep.subr.mxu0 0.0
    %110 = vmatpush1.msra.mxu0 0.0
    %111 = vmatprep.subr.mxu0 0.0
    %112 = vmatpush1.msra.mxu0 0.0
    %113 = vmatprep.subr.mxu0 0.0
    %114 = vmatpush1.msra.mxu0 0.0
    %115 = vmatprep.subr.mxu0 0.0
    %116 = vmatpush1.msra.mxu0 0.0
    %117 = vmatprep.subr.mxu0 0.0
    %118 = vmatpush1.msra.mxu0 0.0
    %119 = vmatprep.subr.mxu0 0.0
    %120 = vmatpush1.msra.mxu0 0.0
    %121 = vmatprep.subr.mxu0 0.0
    %122 = vmatpush1.msra.mxu0 0.0
    %123 = vmatprep.subr.mxu0 0.0
    %124 = vmatpush1.msra.mxu0 0.0
    %125 = vmatprep.subr.mxu0 0.0
    %126 = vmatpush1.msra.mxu0 0.0
    %127 = vmatprep.subr.mxu0 0.0
    %128 = vmatpush1.msra.mxu0 0.0
    %129 = vmatprep.subr.mxu0 0.0
    %130 = vmatpush1.msra.mxu0 0.0
    %131 = vmatprep.subr.mxu0 0.0
    %132 = vmatpush1.msra.mxu0 0.0
    %133 = vmatprep.subr.mxu0 0.0
    %134 = vmatpush1.msra.mxu0 0.0
    %135 = vmatprep.subr.mxu0 0.0
    %136 = vmatpush1.msra.mxu0 0.0
    %137 = vmatprep.subr.mxu0 0.0
    %138 = vmatpush1.msra.mxu0 0.0
    %139 = vmatprep.subr.mxu0 0.0
    %140 = vmatpush1.msra.mxu0 0.0
    %141 = vmatprep.subr.mxu0 0.0
    %142 = vmatpush1.msra.mxu0 0.0
    %143 = vmatprep.subr.mxu0 0.0
    %144 = vmatpush1.msra.mxu0 0.0
    %145 = vmatprep.subr.mxu0 0.0
    %146 = vmatpush1.msra.mxu0 0.0
    %147 = vmatprep.subr.mxu0 0.0
    %148 = vmatpush1.msra.mxu0 0.0
    %149 = vmatprep.subr.mxu0 0.0
    %150 = vmatpush1.msra.mxu0 0.0
    %151 = vmatprep.subr.mxu0 0.0
    %152 = vmatpush1.msra.mxu0 0.0
    %153 = vmatprep.subr.mxu0 0.0
    %154 = vmatpush1.msra.mxu0 0.0
    %155 = vmatprep.subr.mxu0 0.0
    %156 = vmatpush1.msra.mxu0 0.0
    %157 = vmatprep.subr.mxu0 0.0
    %158 = vmatpush1.msra.mxu0 0.0
    %159 = vmatprep.subr.mxu0 0.0
    %160 = vmatpush1.msra.mxu0 0.0
    %161 = vmatprep.subr.mxu0 0.0
    %162 = vmatpush1.msra.mxu0 0.0
    %163 = vmatprep.subr.mxu0 0.0
    %164 = vmatpush1.msra.mxu0 0.0
    %165 = vmatprep.mubr.f32.mxu0 0.0
    %166 = vmatmul.mubr.f32.gmra.mrb[0].mxu0 %v99
    %v167 = vpop.f32.mrb[0].mxu0
    %v168 = vadd.f32 %v95, %v167
    %v169 = vpop.f32.mrb[0].mxu0
    %170 = vdwg.mxu0
    %v171 = vmax.f32 %v168, 0.0
    %v172 = vld [vmem:[#allocation7] sm:$0xff]
    %v173 = vld [vmem:[#allocation7 + $0x8] sm:$0xff]
    %v174 = vld [vmem:[#allocation7 + $0x10] sm:$0xff]
    %v175 = vld [vmem:[#allocation7 + $0x18] sm:$0xff]
    %v176 = vld [vmem:[#allocation7 + $0x20] sm:$0xff]
    %v177 = vld [vmem:[#allocation7 + $0x28] sm:$0xff]
    %v178 = vld [vmem:[#allocation7 + $0x30] sm:$0xff]
    %v179 = vld [vmem:[#allocation7 + $0x38] sm:$0xff]
    %v180 = vld [vmem:[%s4] sm:$0x1]
    %v182 = vlaneseq
    %v183 = vshrl.u32 %v182, 7
    %v184 = vsub.s32 0, %v183
    %v185 = vrot.slane %v180, %v184
    %vm187 = vcmask 523264
    %v189 = vsel %vm187, %v171, 0
    %191 = vmatprep.subr.mxu0 0.0
    %192 = vmatpush1.msra.mxu0 %v172
    %193 = vmatprep.subr.mxu0 0.0
    %194 = vmatpush1.msra.mxu0 %v173
    %195 = vmatprep.subr.mxu0 0.0
    %196 = vmatpush1.msra.mxu0 %v174
    %197 = vmatprep.subr.mxu0 0.0
    %198 = vmatpush1.msra.mxu0 %v175
    %199 = vmatprep.subr.mxu0 0.0
    %200 = vmatpush1.msra.mxu0 %v176
    %201 = vmatprep.subr.mxu0 0.0
    %202 = vmatpush1.msra.mxu0 %v177
    %203 = vmatprep.subr.mxu0 0.0
    %204 = vmatpush1.msra.mxu0 %v178
    %205 = vmatprep.subr.mxu0 0.0
    %206 = vmatpush1.msra.mxu0 %v179
    %207 = vmatprep.subr.mxu0 0.0
    %208 = vmatpush1.msra.mxu0 0.0
    %209 = vmatprep.subr.mxu0 0.0
    %210 = vmatpush1.msra.mxu0 0.0
    %211 = vmatprep.subr.mxu0 0.0
    %212 = vmatpush1.msra.mxu0 0.0
    %213 = vmatprep.subr.mxu0 0.0
    %214 = vmatpush1.msra.mxu0 0.0
    %215 = vmatprep.subr.mxu0 0.0
    %216 = vmatpush1.msra.mxu0 0.0
    %217 = vmatprep.subr.mxu0 0.0
    %218 = vmatpush1.msra.mxu0 0.0
    %219 = vmatprep.subr.mxu0 0.0
    %220 = vmatpush1.msra.mxu0 0.0
    %221 = vmatprep.subr.mxu0 0.0
    %222 = vmatpush1.msra.mxu0 0.0
    %223 = vmatprep.subr.mxu0 0.0
    %224 = vmatpush1.msra.mxu0 0.0
    %225 = vmatprep.subr.mxu0 0.0
    %226 = vmatpush1.msra.mxu0 0.0
    %227 = vmatprep.subr.mxu0 0.0
    %228 = vmatpush1.msra.mxu0 0.0
    %229 = vmatprep.subr.mxu0 0.0
    %230 = vmatpush1.msra.mxu0 0.0
    %231 = vmatprep.subr.mxu0 0.0
    %232 = vmatpush1.msra.mxu0 0.0
    %233 = vmatprep.subr.mxu0 0.0
    %234 = vmatpush1.msra.mxu0 0.0
    %235 = vmatprep.subr.mxu0 0.0
    %236 = vmatpush1.msra.mxu0 0.0
    %237 = vmatprep.subr.mxu0 0.0
    %238 = vmatpush1.msra.mxu0 0.0
    %239 = vmatprep.subr.mxu0 0.0
    %240 = vmatpush1.msra.mxu0 0.0
    %241 = vmatprep.subr.mxu0 0.0
    %242 = vmatpush1.msra.mxu0 0.0
    %243 = vmatprep.subr.mxu0 0.0
    %244 = vmatpush1.msra.mxu0 0.0
    %245 = vmatprep.subr.mxu0 0.0
    %246 = vmatpush1.msra.mxu0 0.0
    %247 = vmatprep.subr.mxu0 0.0
    %248 = vmatpush1.msra.mxu0 0.0
    %249 = vmatprep.subr.mxu0 0.0
    %250 = vmatpush1.msra.mxu0 0.0
    %251 = vmatprep.subr.mxu0 0.0
    %252 = vmatpush1.msra.mxu0 0.0
    %253 = vmatprep.subr.mxu0 0.0
    %254 = vmatpush1.msra.mxu0 0.0
    %255 = vmatprep.mubr.f32.mxu0 0.0
    %256 = vmatmul.mubr.f32.gmra.mrb[0].mxu0 %v189
    %v257 = vpop.f32.mrb[0].mxu0
    %v258 = vadd.f32 %v185, %v257
    %v259 = vpop.f32.mrb[0].mxu0
    %260 = vdwg.mxu0
    %v261 = vmax.f32 %v258, 0.0
    %v262 = vld [vmem:[#allocation8] sm:$0xff]
    %v263 = vld [vmem:[#allocation8 + $0x8] sm:$0xff]
    %v264 = vld [vmem:[#allocation8 + $0x10] sm:$0xff]
    %v265 = vld [vmem:[#allocation8 + $0x18] sm:$0xff]
    %v266 = vld [vmem:[#allocation8 + $0x20] sm:$0xff]
    %v267 = vld [vmem:[#allocation8 + $0x28] sm:$0xff]
    %v268 = vld [vmem:[#allocation8 + $0x30] sm:$0xff]
    %v269 = vld [vmem:[#allocation8 + $0x38] sm:$0xff]
    %v270 = vld [vmem:[%s6] sm:$0x1]
    %v272 = vlaneseq
    %v273 = vshrl.u32 %v272, 7
    %v274 = vsub.s32 0, %v273
    %v275 = vrot.slane %v270, %v274
    %v278 = vsel %vm187, %v261, 0
    %280 = vmatprep.subr.mxu0 0.0
    %281 = vmatpush1.msra.mxu0 %v262
    %282 = vmatprep.subr.mxu0 0.0
    %283 = vmatpush1.msra.mxu0 %v263
    %284 = vmatprep.subr.mxu0 0.0
    %285 = vmatpush1.msra.mxu0 %v264
    %286 = vmatprep.subr.mxu0 0.0
    %287 = vmatpush1.msra.mxu0 %v265
    %288 = vmatprep.subr.mxu0 0.0
    %289 = vmatpush1.msra.mxu0 %v266
    %290 = vmatprep.subr.mxu0 0.0
    %291 = vmatpush1.msra.mxu0 %v267
    %292 = vmatprep.subr.mxu0 0.0
    %293 = vmatpush1.msra.mxu0 %v268
    %294 = vmatprep.subr.mxu0 0.0
    %295 = vmatpush1.msra.mxu0 %v269
    %296 = vmatprep.subr.mxu0 0.0
    %297 = vmatpush1.msra.mxu0 0.0
    %298 = vmatprep.subr.mxu0 0.0
    %299 = vmatpush1.msra.mxu0 0.0
    %300 = vmatprep.subr.mxu0 0.0
    %301 = vmatpush1.msra.mxu0 0.0
    %302 = vmatprep.subr.mxu0 0.0
    %303 = vmatpush1.msra.mxu0 0.0
    %304 = vmatprep.subr.mxu0 0.0
    %305 = vmatpush1.msra.mxu0 0.0
    %306 = vmatprep.subr.mxu0 0.0
    %307 = vmatpush1.msra.mxu0 0.0
    %308 = vmatprep.subr.mxu0 0.0
    %309 = vmatpush1.msra.mxu0 0.0
    %310 = vmatprep.subr.mxu0 0.0
    %311 = vmatpush1.msra.mxu0 0.0
    %312 = vmatprep.subr.mxu0 0.0
    %313 = vmatpush1.msra.mxu0 0.0
    %314 = vmatprep.subr.mxu0 0.0
    %315 = vmatpush1.msra.mxu0 0.0
    %316 = vmatprep.subr.mxu0 0.0
    %317 = vmatpush1.msra.mxu0 0.0
    %318 = vmatprep.subr.mxu0 0.0
    %319 = vmatpush1.msra.mxu0 0.0
    %320 = vmatprep.subr.mxu0 0.0
    %321 = vmatpush1.msra.mxu0 0.0
    %322 = vmatprep.subr.mxu0 0.0
    %323 = vmatpush1.msra.mxu0 0.0
    %324 = vmatprep.subr.mxu0 0.0
    %325 = vmatpush1.msra.mxu0 0.0
    %326 = vmatprep.subr.mxu0 0.0
    %327 = vmatpush1.msra.mxu0 0.0
    %328 = vmatprep.subr.mxu0 0.0
    %329 = vmatpush1.msra.mxu0 0.0
    %330 = vmatprep.subr.mxu0 0.0
    %331 = vmatpush1.msra.mxu0 0.0
    %332 = vmatprep.subr.mxu0 0.0
    %333 = vmatpush1.msra.mxu0 0.0
    %334 = vmatprep.subr.mxu0 0.0
    %335 = vmatpush1.msra.mxu0 0.0
    %336 = vmatprep.subr.mxu0 0.0
    %337 = vmatpush1.msra.mxu0 0.0
    %338 = vmatprep.subr.mxu0 0.0
    %339 = vmatpush1.msra.mxu0 0.0
    %340 = vmatprep.subr.mxu0 0.0
    %341 = vmatpush1.msra.mxu0 0.0
    %342 = vmatprep.subr.mxu0 0.0
    %343 = vmatpush1.msra.mxu0 0.0
    %344 = vmatprep.mubr.f32.mxu0 0.0
    %345 = vmatmul.mubr.f32.gmra.mrb[0].mxu0 %v278
    %v346 = vpop.f32.mrb[0].mxu0
    %v347 = vadd.f32 %v275, %v346
    %v348 = vpop.f32.mrb[0].mxu0
    %349 = vdwg.mxu0
    %v350 = vld [vmem:[%s7] sm:$0x1]
    %v352 = vlaneseq
    %v353 = vshrl.u32 %v352, 7
    %v354 = vsub.s32 0, %v353
    %v355 = vrot.slane %v350, %v354
    %v357 = vadd.f32 %v347, %v355
    %358 = vmax.xlane.f32.xlu0 %v357
    %v359 = vpop.xlane.xlu0 %358
    %v360 = vsub.f32 %v357, %v359
    %v361 = vmul.f32 %v360, 1.442695
    %v362 = vpow.pop %v361
    %363 = vadd.xlane.f32.xlu0 %v362
    %v364 = vpop.xlane.xlu0 %363
    %v365 = vrcp.pop %v364
    %v366 = vmul.f32 %v362, %v365
    %vm367 = vcmask 130048
    %368 = vst.msk [vmem:[#allocation10] sm:$0xff] %vm367, %v366
    %370 = vrot.lane.b32.xlu0 %v347, 112
    %v371 = vpop.permute.xlu0 %370
    %vm373 = vcmask 7168
    %374 = vst.msk [vmem:[%s9] sm:$0xff] %vm373, %v371
    // Predicated region
    $region50: #{tpu_custom_call.1} parent=1 // pred_check
      _
    $region51: #{tpu_custom_call.1} parent=1 // pred_check_branch
      %376 = sbr.rel (0) target = $region53
    $region52: #{tpu_custom_call.1} parent=1 // pred_region
      %s378 = ssub.s32 128, 128
      %379 = vsyncadd [#allocation4], %s378
      %s381 = sshll.u32 [#allocation10], 4
      %s382 = int_to_ptr.vmem [resolvable:$true] %s381
      %384 = dma.vmem_to_hbm [thread:$0]  %s382, 128, %s8, [#allocation4]
    $region53: #{tpu_custom_call.1} parent=1 // pred_fallthru
      _
    // Predicated region
    $region54: #{tpu_custom_call.1} parent=1 // pred_check
      _
    $region55: #{tpu_custom_call.1} parent=1 // pred_check_branch
      %386 = sbr.rel (0) target = $region57
    $region56: #{tpu_custom_call.1} parent=1 // pred_region
      _
    $region57: #{tpu_custom_call.1} parent=1 // pred_fallthru
      _
    // Predicated region
    $region58: #{tpu_custom_call.1} parent=1 // pred_check
      _
    $region59: #{tpu_custom_call.1} parent=1 // pred_check_branch
      %388 = sbr.rel (0) target = $region61
    $region60: #{tpu_custom_call.1} parent=1 // pred_region
      %389 = dma.done [#allocation4], 128
    $region61: #{tpu_custom_call.1} parent=1 // pred_fallthru
      _
    // Predicated region
    $region62: #{tpu_custom_call.1} parent=1 // pred_check
      _
    $region63: #{tpu_custom_call.1} parent=1 // pred_check_branch
      %391 = sbr.rel (0) target = $region65
    $region64: #{tpu_custom_call.1} parent=1 // pred_region
      _
    $region65: #{tpu_custom_call.1} parent=1 // pred_fallthru
      _
    %392 = vsyncpa [#allocation3], 1
    %393 = vsyncpa [#allocation6], 1
    %394 = vsyncpa [#allocation9], 1
    %395 = vsyncpa [#allocation4], 1

</llo_original>
